<compile_context>
chip_gen: v5e
topology: v5e:2x2
jax: 0.10.0
libtpu: 0.0.40
codegen_flags: <defaults>
</compile_context>

<pallas_src>
import jax
import jax.numpy as jnp
from jax.experimental import pallas as pl
from jax.experimental.pallas import tpu as pltpu

_LANE = 128
_SUBLANE = 8


def _round_up(n, m):
    return ((n + m - 1) // m) * m


def _cdiv(a, b):
    return (a + b - 1) // b


def _tf_embed_kernel(x_ref, w_ref, o_ref):
    # x_ref: (tile_m, d_inp), w_ref: (d_inp, d_model), o_ref: (tile_m, d_model)
    x = x_ref[...]
    w = w_ref[...]
    # K-unrolled VPU broadcast-mul-add (d_inp is static and tiny: 1..6).
    acc = x[:, 0:1] * w[0:1, :]
    for k in range(1, x.shape[1]):
        acc = acc + x[:, k:k + 1] * w[k:k + 1, :]
    o_ref[...] = acc.astype(o_ref.dtype)


def _choose_tile_m(M, d_model, itemsize):
    """Row tile: >=~8 MiB of output per step, double-buffered blocks <=~24 MiB
    of VMEM (v7x-safe), multiple of 8, and an even number of steps when we can
    (v7x megacore balance)."""
    lane_cols = max(_round_up(d_model, _LANE), _LANE)  # lane footprint per row
    # x block is lane-padded to 128 lanes in VMEM; both blocks double-buffered.
    bytes_per_row = 2 * (_LANE + lane_cols) * itemsize
    vmem_budget = 24 << 20
    tm_vmem = max(_SUBLANE, vmem_budget // bytes_per_row)
    tm_target = max(_SUBLANE, (8 << 20) // (lane_cols * itemsize))
    tm = min(tm_vmem, tm_target)
    tm = max(_SUBLANE, (tm // _SUBLANE) * _SUBLANE)
    if tm >= M:
        return M  # single full-extent block (always layout-legal)
    steps = _cdiv(M, tm)
    if steps > 1 and steps % 2 == 1:
        steps += 1  # prefer an even grid so both v7x TensorCores get work
        tm = max(_SUBLANE, _round_up(_cdiv(M, steps), _SUBLANE))
    return min(tm, M)


def _vmem_limit_bytes(tm, d_model, itemsize):
    lane_cols = max(_round_up(d_model, _LANE), _LANE)
    est = 2 * tm * (_LANE + lane_cols) * itemsize     # double-buffered x + out
    est += _SUBLANE * lane_cols * itemsize            # resident weight block
    est += 4 << 20                                    # headroom
    return int(min(max(est, 16 << 20), 40 << 20))


def time_feature_embedding(x, w, *, tile_m=None, out_dtype=None,
                           min_pallas_elems=1 << 20, force_pallas=False):
    """Forward of TimeFeatureEmbedding: Linear(d_inp -> d_model, bias=False).

    x: (B, L, d_inp)
    w: (d_model, d_inp)  -- PyTorch nn.Linear weight layout
    returns: (B, L, d_model)
    """
    B, L, d_inp = x.shape
    d_model = w.shape[0]
    M = B * L
    out_dtype = out_dtype or x.dtype

    # Small-problem fallback: at toy/serving sizes the kernel is pure launch
    # overhead; let XLA fuse it.
    if not force_pallas and M * d_model < min_pallas_elems:
        return jnp.einsum("bld,nd->bln", x, w).astype(out_dtype)

    itemsize = jnp.dtype(x.dtype).itemsize
    tm = tile_m if tile_m is not None else _choose_tile_m(M, d_model, itemsize)
    tm = min(tm, M)
    if tm != M and tm % _SUBLANE != 0:
        tm = (tm // _SUBLANE) * _SUBLANE or M

    x2d = x.reshape(M, d_inp)
    w_t = w.T  # (d_inp, d_model); tiny, stays VMEM-resident across all steps

    cost = pl.CostEstimate(
        flops=2 * M * d_inp * d_model,
        bytes_accessed=(itemsize * (M * d_inp + d_inp * d_model)
                        + jnp.dtype(out_dtype).itemsize * M * d_model),
        transcendentals=0,
    )

    out = pl.pallas_call(
        _tf_embed_kernel,
        out_shape=jax.ShapeDtypeStruct((M, d_model), out_dtype),
        grid=(_cdiv(M, tm),),
        in_specs=[
            # Row tile marches down the flattened (B*L) axis; ragged last block
            # is masked by Pallas, so no M padding / epilogue slice is needed.
            pl.BlockSpec((tm, d_inp), lambda i: (i, 0)),
            # Tiny weight: same block every step -> stays VMEM-resident.
            pl.BlockSpec((d_inp, d_model), lambda i: (0, 0)),
        ],
        out_specs=pl.BlockSpec((tm, d_model), lambda i: (i, 0)),
        compiler_params=pltpu.CompilerParams(
            # Independent row tiles: shard across TensorCores (v7x megacore).
            dimension_semantics=("parallel",),
            # Raise v5e's 16 MiB default scope; stays within v7x's 64 MiB part.
            vmem_limit_bytes=_vmem_limit_bytes(tm, d_model, itemsize),
        ),
        cost_estimate=cost,
    )(x2d, w_t)

    return out.reshape(B, L, d_model)


if __name__ == "__main__":
    # Module config: freq='h' -> d_inp = 4; small d_model for the demo.
    d_inp = 4
    d_model = 32
    B, L = 2, 8

    key = jax.random.PRNGKey(0)
    kx, kw = jax.random.split(key)

    # PyTorch weight layout: (d_model, d_inp).
    w = jax.random.normal(kw, (d_model, d_inp), dtype=jnp.float32) * 0.1
    x = jax.random.normal(kx, (B, L, d_inp), dtype=jnp.float32)

    # force_pallas=True so the demo exercises the kernel despite the tiny size
    # (the production default would fall back to a fused einsum here).
    out = jax.block_until_ready(time_feature_embedding(x, w, force_pallas=True))

    # Reference check (same semantics as nn.Linear(bias=False)).
    ref = jnp.einsum("bld,md->blm", x, w)
    assert out.shape == (B, L, d_model)
    assert jnp.allclose(out, ref, atol=1e-5, rtol=1e-5)

    print("KERNEL_OK")
</pallas_src>

<mosaic_0001>
module attributes {stable_mosaic.version = 11 : i64} {
  func.func @_tf_embed_kernel(%arg0: i32, %arg1: memref<16x4xf32, #tpu.memory_space<vmem>>, %arg2: memref<4x32xf32, #tpu.memory_space<vmem>>, %arg3: memref<16x32xf32, #tpu.memory_space<vmem>>) attributes {dimension_semantics = [#tpu.dimension_semantics<parallel>], iteration_bounds = array<i64: 1>, scalar_prefetch = 0 : i64, scratch_operands = 0 : i64, tpu.core_type = #tpu.core_type<tc>, window_params = [{transform_indices = @transform_0, window_bounds = array<i64: 16, 4>}, {pipeline_mode = #tpu.pipeline_mode<synchronous>, transform_indices = @transform_1, window_bounds = array<i64: 4, 32>}, {transform_indices = @transform_2, window_bounds = array<i64: 16, 32>}]} {
    %c0 = arith.constant 0 : index
    %c0_0 = arith.constant 0 : index
    %0 = vector.load %arg1[%c0, %c0_0] : memref<16x4xf32, #tpu.memory_space<vmem>>, vector<16x4xf32>
    %c0_1 = arith.constant 0 : index
    %c0_2 = arith.constant 0 : index
    %1 = vector.load %arg2[%c0_1, %c0_2] : memref<4x32xf32, #tpu.memory_space<vmem>>, vector<4x32xf32>
    %2 = vector.extract_strided_slice %0 {offsets = [0, 0], sizes = [16, 1], strides = [1, 1]} : vector<16x4xf32> to vector<16x1xf32>
    %3 = vector.extract_strided_slice %1 {offsets = [0, 0], sizes = [1, 32], strides = [1, 1]} : vector<4x32xf32> to vector<1x32xf32>
    %4 = vector.broadcast %2 : vector<16x1xf32> to vector<16x32xf32>
    %5 = vector.broadcast %3 : vector<1x32xf32> to vector<16x32xf32>
    %6 = arith.mulf %4, %5 : vector<16x32xf32>
    %7 = vector.extract_strided_slice %0 {offsets = [0, 1], sizes = [16, 1], strides = [1, 1]} : vector<16x4xf32> to vector<16x1xf32>
    %8 = vector.extract_strided_slice %1 {offsets = [1, 0], sizes = [1, 32], strides = [1, 1]} : vector<4x32xf32> to vector<1x32xf32>
    %9 = vector.broadcast %7 : vector<16x1xf32> to vector<16x32xf32>
    %10 = vector.broadcast %8 : vector<1x32xf32> to vector<16x32xf32>
    %11 = arith.mulf %9, %10 : vector<16x32xf32>
    %12 = arith.addf %6, %11 : vector<16x32xf32>
    %13 = vector.extract_strided_slice %0 {offsets = [0, 2], sizes = [16, 1], strides = [1, 1]} : vector<16x4xf32> to vector<16x1xf32>
    %14 = vector.extract_strided_slice %1 {offsets = [2, 0], sizes = [1, 32], strides = [1, 1]} : vector<4x32xf32> to vector<1x32xf32>
    %15 = vector.broadcast %13 : vector<16x1xf32> to vector<16x32xf32>
    %16 = vector.broadcast %14 : vector<1x32xf32> to vector<16x32xf32>
    %17 = arith.mulf %15, %16 : vector<16x32xf32>
    %18 = arith.addf %12, %17 : vector<16x32xf32>
    %19 = vector.extract_strided_slice %0 {offsets = [0, 3], sizes = [16, 1], strides = [1, 1]} : vector<16x4xf32> to vector<16x1xf32>
    %20 = vector.extract_strided_slice %1 {offsets = [3, 0], sizes = [1, 32], strides = [1, 1]} : vector<4x32xf32> to vector<1x32xf32>
    %21 = vector.broadcast %19 : vector<16x1xf32> to vector<16x32xf32>
    %22 = vector.broadcast %20 : vector<1x32xf32> to vector<16x32xf32>
    %23 = arith.mulf %21, %22 : vector<16x32xf32>
    %24 = arith.addf %18, %23 : vector<16x32xf32>
    %c0_3 = arith.constant 0 : index
    %c0_4 = arith.constant 0 : index
    %25 = vector.load %arg3[%c0_3, %c0_4] : memref<16x32xf32, #tpu.memory_space<vmem>>, vector<16x32xf32>
    tpu.vector_store %arg3[%c0_3, %c0_4], %24 {strides = array<i32>} : memref<16x32xf32, #tpu.memory_space<vmem>>, vector<16x32xf32>,
    return
  }
  func.func @transform_0(%arg0: i32) -> (i32, i32) {
    %c0_i32 = arith.constant 0 : i32
    %c0_i32_0 = arith.constant 0 : i32
    return %arg0, %c0_i32 : i32, i32
  }
  func.func @transform_1(%arg0: i32) -> (i32, i32) {
    %c0_i32 = arith.constant 0 : i32
    %c0_i32_0 = arith.constant 0 : i32
    %c0_i32_1 = arith.constant 0 : i32
    return %c0_i32, %c0_i32_0 : i32, i32
  }
  func.func @transform_2(%arg0: i32) -> (i32, i32) {
    %c0_i32 = arith.constant 0 : i32
    %c0_i32_0 = arith.constant 0 : i32
    return %arg0, %c0_i32 : i32, i32
  }
}

</mosaic_0001>

<llo_original>
// kernel: tpu_custom_call.1
$region0: #{tpu_custom_call.1}
  #allocation0 [shape = 'u32[]', space=smem, size = 0x4, offset = 0x4, fixed_abs, tag = 'smem constant byte address 0x4 - core index']
  #allocation1 [shape = 'u32[72,128]{1,0:T(1,128)}', space=vmem, size = 0x9000, scoped, tag = 'internal scratch']
  %s0 = inlined_call_operand.vmem [shape: f32[16,4], index: 0, kind: input, shape index: {}]
  %s1 = inlined_call_operand.vmem [shape: f32[4,32], index: 1, kind: input, shape index: {}]
  %s2 = inlined_call_operand.hbm [shape: f32[16,32], index: 2, kind: output, shape index: {}]
  %s3 = sld [smem:[#allocation0]]
  $region18: #{tpu_custom_call.1} parent=0
    _
  %s5 = ssub.s32 1, %s3
  %s6 = scalar_select 0, %s5, %s3
  $region1: #{tpu_custom_call.1} parent=0
    #allocation2 [shape = 'u8[8192]{0}', space=vmem, size = 0x2000, scoped, tag = 'output window, operand 0, single buffered']
    #allocation3 [shape = 's32[1]{0}', space=sflag, size = 0x4, scoped, tag = 'scoped memory for tpu_custom_call.1']
    %7 = vsyncpa [#allocation3], 0
    // Predicated region
    $region2: #{tpu_custom_call.1} parent=1 // pred_check
      _
    $region3: #{tpu_custom_call.1} parent=1 // pred_check_branch
      %9 = sbr.rel (0) target = $region5
    $region4: #{tpu_custom_call.1} parent=1 // pred_region
      _
    $region5: #{tpu_custom_call.1} parent=1 // pred_fallthru
      _
    // Predicated region
    $region6: #{tpu_custom_call.1} parent=1 // pred_check
      _
    $region7: #{tpu_custom_call.1} parent=1 // pred_check_branch
      %11 = sbr.rel (0) target = $region9
    $region8: #{tpu_custom_call.1} parent=1 // pred_region
      _
    $region9: #{tpu_custom_call.1} parent=1 // pred_fallthru
      _
    %v12 = vld [vmem:[%s0] sm:$0xff]
    %v13 = vld [vmem:[%s0 + $0x8] sm:$0xff]
    %v14 = vld [vmem:[%s1] sm:$0xf]
    %16 = vset.pattern.permute.xlu0 0
    %17 = vperm.xlu0 %16, %v12
    %v18 = vpop.permute.xlu0 %17
    %21 = vset.pattern.permute.xlu0 0
    %22 = vperm.xlu0 %21, %v13
    %v23 = vpop.permute.xlu0 %22
    %v25 = vperm.slane %v14, 0
    %v26 = vmul.f32 %v18, %v25
    %v27 = vmul.f32 %v23, %v25
    %28 = vset.pattern.permute.xlu0 1
    %29 = vperm.xlu0 %28, %v12
    %v30 = vpop.permute.xlu0 %29
    %32 = vset.pattern.permute.xlu0 1
    %33 = vperm.xlu0 %32, %v13
    %v34 = vpop.permute.xlu0 %33
    %v36 = vperm.slane %v14, 1
    %v37 = vmul.f32 %v30, %v36
    %v38 = vmul.f32 %v34, %v36
    %v39 = vadd.f32 %v26, %v37
    %v40 = vadd.f32 %v27, %v38
    %41 = vset.pattern.permute.xlu0 2
    %42 = vperm.xlu0 %41, %v12
    %v43 = vpop.permute.xlu0 %42
    %45 = vset.pattern.permute.xlu0 2
    %46 = vperm.xlu0 %45, %v13
    %v47 = vpop.permute.xlu0 %46
    %v49 = vperm.slane %v14, 2
    %v50 = vmul.f32 %v43, %v49
    %v51 = vmul.f32 %v47, %v49
    %v52 = vadd.f32 %v39, %v50
    %v53 = vadd.f32 %v40, %v51
    %54 = vset.pattern.permute.xlu0 3
    %55 = vperm.xlu0 %54, %v12
    %v56 = vpop.permute.xlu0 %55
    %58 = vset.pattern.permute.xlu0 3
    %59 = vperm.xlu0 %58, %v13
    %v60 = vpop.permute.xlu0 %59
    %v62 = vperm.slane %v14, 3
    %v63 = vmul.f32 %v56, %v62
    %v64 = vmul.f32 %v60, %v62
    %v65 = vadd.f32 %v52, %v63
    %v66 = vadd.f32 %v53, %v64
    %vm67 = vcmask 261120
    %68 = vst.msk [vmem:[#allocation2] sm:$0xff] %vm67, %v65
    %69 = vst.msk [vmem:[#allocation2 + $0x8] sm:$0xff] %vm67, %v66
    // Predicated region
    $region10: #{tpu_custom_call.1} parent=1 // pred_check
      _
    $region11: #{tpu_custom_call.1} parent=1 // pred_check_branch
      %71 = sbr.rel (0) target = $region13
    $region12: #{tpu_custom_call.1} parent=1 // pred_region
      %73 = vsyncadd [#allocation3], 0
      %s74 = sshll.u32 [#allocation2], 4
      %s75 = int_to_ptr.vmem [resolvable:$true] %s74
      %s76 = sshll.u32 %s2, 4
      %s77 = int_to_ptr.hbm [resolvable:$true] %s76
      %82 = dma.vmem_to_hbm [thread:$0]  %s75, 256, %s77, [#allocation3], 128, 128, 8
    $region13: #{tpu_custom_call.1} parent=1 // pred_fallthru
      _
    // Predicated region
    $region14: #{tpu_custom_call.1} parent=1 // pred_check
      _
    $region15: #{tpu_custom_call.1} parent=1 // pred_check_branch
      %84 = sbr.rel (0) target = $region17
    $region16: #{tpu_custom_call.1} parent=1 // pred_region
      %86 = dma.done [#allocation3], 256
    $region17: #{tpu_custom_call.1} parent=1 // pred_fallthru
      _
    %87 = vsyncpa [#allocation3], 1

</llo_original>
